<compile_context>
chip_gen: v7x
topology: tpu7x:2x2x1
jax: 0.10.0
libtpu: 0.0.40
codegen_flags: <defaults>
</compile_context>

<pallas_src>
import jax
import jax.numpy as jnp
from jax.experimental import pallas as pl
from jax.experimental.pallas import tpu as pltpu


def value_fn_kernel(xT_ref, w1T_ref, b1_ref, w2_ref, b2_ref, o_ref):
    # xT:  [6, block_b]   (features on sublanes, batch on lanes)
    # w1T: [512, 6]       (PyTorch input.weight layout [out, in])
    # b1:  [512, 1]
    # w2:  [1, 512]       (PyTorch output.weight layout)
    # b2:  [1, 1]  scalar in SMEM
    # o:   [1, block_b]   lane-dense value row
    hT = jnp.dot(w1T_ref[...], xT_ref[...],
                 preferred_element_type=jnp.float32)          # MXU: [512, block_b]
    hT = jnp.maximum(hT + b1_ref[...], 0.0)                   # VPU: bias + ReLU
    v = jnp.dot(w2_ref[...], hT,
                preferred_element_type=jnp.float32)           # MXU: [1, block_b]
    o_ref[...] = (v + b2_ref[0, 0]).astype(o_ref.dtype)


def _round_up(n, m):
    return ((n + m - 1) // m) * m


def value_function_forward(x, w1T, b1, w2_row, b2, *, max_block_b=4096):
    """ValueFunction forward.  x: [B, 6] f32 -> [B, 1] f32.

    w1T = input.weight [512, 6], b1 = input.bias as [512, 1],
    w2_row = output.weight [1, 512], b2 = output.bias as [1, 1].
    """
    B = x.shape[0]
    # Transposed activations: batch on the lane axis -> both layers on the MXU and a
    # naturally lane-dense output. (x itself is tiny: B*6*4 bytes.)
    xT = x.T  # [6, B]

    # Batch tile: multiple of 128 lanes; keep >= 2 blocks whenever B >= 256 so v7x's
    # two TensorCores both get work; cap so the [512, block_b] activation (~8 MiB at
    # 4096) stays well inside the default scoped-VMEM limit on every generation.
    block_b = min(max_block_b, max(128, _round_up(pl.cdiv(B, 2), 128)))
    nb = pl.cdiv(B, block_b)
    padded_b = nb * block_b  # only the small output row is padded; x is never copied

    out = pl.pallas_call(
        value_fn_kernel,
        out_shape=jax.ShapeDtypeStruct((1, padded_b), jnp.float32),
        grid=(nb,),
        in_specs=[
            pl.BlockSpec((6, block_b), lambda i: (0, i)),       # xT batch tile (partial last block handled by Pallas)
            pl.BlockSpec((512, 6), lambda i: (0, 0)),           # w1T, VMEM-resident across steps
            pl.BlockSpec((512, 1), lambda i: (0, 0)),           # b1, VMEM-resident
            pl.BlockSpec((1, 512), lambda i: (0, 0)),           # w2, VMEM-resident
            pl.BlockSpec((1, 1), lambda i: (0, 0),
                         memory_space=pltpu.MemorySpace.SMEM),  # b2 scalar
        ],
        out_specs=pl.BlockSpec((1, block_b), lambda i: (0, i)),  # lane-dense value row
        compiler_params=pltpu.CompilerParams(
            dimension_semantics=("parallel",)),                  # batch blocks shard across TCs on v7x
    )(xT, w1T, b1, w2_row, b2)

    return out[0, :B].reshape(B, 1)


def init_params(key):
    """nn.Linear default init U(-1/sqrt(fan_in), 1/sqrt(fan_in)), PyTorch weight layouts."""
    k1, k2, k3, k4 = jax.random.split(key, 4)
    in1, out1 = 6, 512
    in2, out2 = 512, 1
    bound1 = 1.0 / jnp.sqrt(jnp.float32(in1))
    bound2 = 1.0 / jnp.sqrt(jnp.float32(in2))
    w1T = jax.random.uniform(k1, (out1, in1), jnp.float32, -bound1, bound1)      # [512, 6]
    b1 = jax.random.uniform(k2, (out1, 1), jnp.float32, -bound1, bound1)         # [512, 1]
    w2_row = jax.random.uniform(k3, (out2, in2), jnp.float32, -bound2, bound2)   # [1, 512]
    b2 = jax.random.uniform(k4, (1, 1), jnp.float32, -bound2, bound2)            # [1, 1]
    return w1T, b1, w2_row, b2


def _reference(x, w1T, b1, w2_row, b2):
    h = jnp.maximum(x @ w1T.T + b1.T, 0.0)
    return h @ w2_row.T + b2[0, 0]


if __name__ == "__main__":
    key = jax.random.PRNGKey(0)
    pkey, xkey, xkey_big = jax.random.split(key, 3)
    w1T, b1, w2_row, b2 = init_params(pkey)

    # Acrobot observation is 6-dim; small batch of 8 states (single partial block).
    batch = 8
    x = jax.random.normal(xkey, (batch, 6), jnp.float32)
    out = jax.block_until_ready(value_function_forward(x, w1T, b1, w2_row, b2))
    ref = _reference(x, w1T, b1, w2_row, b2)
    assert out.shape == (batch, 1)
    assert jnp.allclose(out, ref, atol=1e-4, rtol=1e-4)

    # Rollout-sized, non-divisible batch: exercises the 2-block grid (v7x split) and
    # the masked partial final block with no jnp.pad copy of x.
    big = 1000
    xb = jax.random.normal(xkey_big, (big, 6), jnp.float32)
    outb = jax.block_until_ready(value_function_forward(xb, w1T, b1, w2_row, b2))
    refb = _reference(xb, w1T, b1, w2_row, b2)
    assert outb.shape == (big, 1)
    assert jnp.allclose(outb, refb, atol=1e-4, rtol=1e-4)

    print("KERNEL_OK")
</pallas_src>

<mosaic_0001>
module attributes {stable_mosaic.version = 11 : i64} {
  func.func @value_fn_kernel(%arg0: i32, %arg1: memref<6x128xf32, #tpu.memory_space<vmem>>, %arg2: memref<512x6xf32, #tpu.memory_space<vmem>>, %arg3: memref<512x1xf32, #tpu.memory_space<vmem>>, %arg4: memref<1x512xf32, #tpu.memory_space<vmem>>, %arg5: memref<1x1xf32, #tpu.memory_space<smem>>, %arg6: memref<1x128xf32, #tpu.memory_space<vmem>>) attributes {dimension_semantics = [#tpu.dimension_semantics<parallel>], iteration_bounds = array<i64: 1>, scalar_prefetch = 0 : i64, scratch_operands = 0 : i64, tpu.core_type = #tpu.core_type<tc>, window_params = [{transform_indices = @transform_0, window_bounds = array<i64: 6, 128>}, {pipeline_mode = #tpu.pipeline_mode<synchronous>, transform_indices = @transform_1, window_bounds = array<i64: 512, 6>}, {pipeline_mode = #tpu.pipeline_mode<synchronous>, transform_indices = @transform_2, window_bounds = array<i64: 512, 1>}, {pipeline_mode = #tpu.pipeline_mode<synchronous>, transform_indices = @transform_3, window_bounds = array<i64: 1, 512>}, {transform_indices = @transform_4, window_bounds = array<i64: 1, 1>}, {transform_indices = @transform_5, window_bounds = array<i64: 1, 128>}]} {
    %c0 = arith.constant 0 : index
    %c0_0 = arith.constant 0 : index
    %0 = vector.load %arg2[%c0, %c0_0] : memref<512x6xf32, #tpu.memory_space<vmem>>, vector<512x6xf32>
    %c0_1 = arith.constant 0 : index
    %c0_2 = arith.constant 0 : index
    %1 = vector.load %arg1[%c0_1, %c0_2] : memref<6x128xf32, #tpu.memory_space<vmem>>, vector<6x128xf32>
    %cst = arith.constant dense<0.000000e+00> : vector<512x128xf32>
    %2 = tpu.matmul %0, %1, %cst {dimension_numbers = #tpu.dot_dimension_numbers<[1], [0], [0], [1], [0, 0, 1, 1], [], []>} : vector<512x6xf32>, vector<6x128xf32>, vector<512x128xf32> -> vector<512x128xf32>
    %c0_3 = arith.constant 0 : index
    %c0_4 = arith.constant 0 : index
    %3 = vector.load %arg3[%c0_3, %c0_4] : memref<512x1xf32, #tpu.memory_space<vmem>>, vector<512x1xf32>
    %4 = vector.broadcast %3 : vector<512x1xf32> to vector<512x128xf32>
    %5 = arith.addf %2, %4 : vector<512x128xf32>
    %cst_5 = arith.constant 0.000000e+00 : f32
    %6 = vector.broadcast %cst_5 : f32 to vector<512x128xf32>
    %7 = arith.maximumf %5, %6 : vector<512x128xf32>
    %c0_6 = arith.constant 0 : index
    %c0_7 = arith.constant 0 : index
    %8 = vector.load %arg4[%c0_6, %c0_7] : memref<1x512xf32, #tpu.memory_space<vmem>>, vector<1x512xf32>
    %cst_8 = arith.constant dense<0.000000e+00> : vector<1x128xf32>
    %9 = tpu.matmul %8, %7, %cst_8 {dimension_numbers = #tpu.dot_dimension_numbers<[1], [0], [0], [1], [0, 0, 1, 1], [], []>} : vector<1x512xf32>, vector<512x128xf32>, vector<1x128xf32> -> vector<1x128xf32>
    %c0_9 = arith.constant 0 : index
    %c0_10 = arith.constant 0 : index
    %10 = memref.load %arg5[%c0_9, %c0_10] : memref<1x1xf32, #tpu.memory_space<smem>>
    %11 = vector.broadcast %10 : f32 to vector<1x128xf32>
    %12 = arith.addf %9, %11 : vector<1x128xf32>
    %c0_11 = arith.constant 0 : index
    %c0_12 = arith.constant 0 : index
    %13 = vector.load %arg6[%c0_11, %c0_12] : memref<1x128xf32, #tpu.memory_space<vmem>>, vector<1x128xf32>
    tpu.vector_store %arg6[%c0_11, %c0_12], %12 {strides = array<i32>} : memref<1x128xf32, #tpu.memory_space<vmem>>, vector<1x128xf32>,
    return
  }
  func.func @transform_0(%arg0: i32) -> (i32, i32) {
    %c0_i32 = arith.constant 0 : i32
    %c0_i32_0 = arith.constant 0 : i32
    return %c0_i32, %arg0 : i32, i32
  }
  func.func @transform_1(%arg0: i32) -> (i32, i32) {
    %c0_i32 = arith.constant 0 : i32
    %c0_i32_0 = arith.constant 0 : i32
    %c0_i32_1 = arith.constant 0 : i32
    return %c0_i32, %c0_i32_0 : i32, i32
  }
  func.func @transform_2(%arg0: i32) -> (i32, i32) {
    %c0_i32 = arith.constant 0 : i32
    %c0_i32_0 = arith.constant 0 : i32
    %c0_i32_1 = arith.constant 0 : i32
    return %c0_i32, %c0_i32_0 : i32, i32
  }
  func.func @transform_3(%arg0: i32) -> (i32, i32) {
    %c0_i32 = arith.constant 0 : i32
    %c0_i32_0 = arith.constant 0 : i32
    %c0_i32_1 = arith.constant 0 : i32
    return %c0_i32, %c0_i32_0 : i32, i32
  }
  func.func @transform_4(%arg0: i32) -> (i32, i32) {
    %c0_i32 = arith.constant 0 : i32
    %c0_i32_0 = arith.constant 0 : i32
    %c0_i32_1 = arith.constant 0 : i32
    return %c0_i32, %c0_i32_0 : i32, i32
  }
  func.func @transform_5(%arg0: i32) -> (i32, i32) {
    %c0_i32 = arith.constant 0 : i32
    %c0_i32_0 = arith.constant 0 : i32
    return %c0_i32, %arg0 : i32, i32
  }
}

</mosaic_0001>

<llo_original>
// kernel: tpu_custom_call.1
$region0: #{tpu_custom_call.1}
  #allocation0 [shape = 'u32[]', space=smem, size = 0x4, offset = 0x4, fixed_abs, tag = 'smem constant byte address 0x4 - core index']
  #allocation1 [shape = 'u32[144,128]{1,0:T(1,128)}', space=vmem, size = 0x12000, scoped, tag = 'internal scratch']
  #allocation2 [shape = 'f32[1,1]{1,0:T(1,128)S(6)}', space=smem, size = 0x200, scoped, tag = 'scoped memory for tpu_custom_call.1']
  %s0 = inlined_call_operand.vmem [shape: f32[6,8], index: 0, kind: input, shape index: {}]
  %s1 = inlined_call_operand.vmem [shape: f32[512,6], index: 1, kind: input, shape index: {}]
  %s2 = inlined_call_operand.vmem [shape: f32[512,1], index: 2, kind: input, shape index: {}]
  %s3 = inlined_call_operand.vmem [shape: f32[1,512], index: 3, kind: input, shape index: {}]
  %s4 = inlined_call_operand.<no memory space> [shape: f32[1,1], index: 4, kind: input, shape index: {}]
  %s5 = inlined_call_operand.hbm [shape: f32[1,128], index: 5, kind: output, shape index: {}]
  %s6 = sld [smem:[#allocation0]]
  $region30: #{tpu_custom_call.1} parent=0
    _
  %s8 = ssub.s32 1, %s6
  %s9 = scalar_select 0, %s8, %s6
  %10 = sst [smem:[#allocation2]] %s4
  $region1: #{tpu_custom_call.1} parent=0
    #allocation3 [shape = 'u8[512]{0}', space=vmem, size = 0x400, scoped, tag = 'output window, operand 0, single buffered']
    #allocation4 [shape = 's32[1]{0}', space=sflag, size = 0x4, scoped, tag = 'scoped memory for tpu_custom_call.1']
    %11 = vsyncpa [#allocation4], 0
    // Predicated region
    $region2: #{tpu_custom_call.1} parent=1 // pred_check
      _
    $region3: #{tpu_custom_call.1} parent=1 // pred_check_branch
      %13 = sbr.rel (0) target = $region5
    $region4: #{tpu_custom_call.1} parent=1 // pred_region
      _
    $region5: #{tpu_custom_call.1} parent=1 // pred_fallthru
      _
    // Predicated region
    $region6: #{tpu_custom_call.1} parent=1 // pred_check
      _
    $region7: #{tpu_custom_call.1} parent=1 // pred_check_branch
      %15 = sbr.rel (0) target = $region9
    $region8: #{tpu_custom_call.1} parent=1 // pred_region
      _
    $region9: #{tpu_custom_call.1} parent=1 // pred_fallthru
      _
    // Predicated region
    $region10: #{tpu_custom_call.1} parent=1 // pred_check
      _
    $region11: #{tpu_custom_call.1} parent=1 // pred_check_branch
      %17 = sbr.rel (0) target = $region13
    $region12: #{tpu_custom_call.1} parent=1 // pred_region
      _
    $region13: #{tpu_custom_call.1} parent=1 // pred_fallthru
      _
    // Predicated region
    $region14: #{tpu_custom_call.1} parent=1 // pred_check
      _
    $region15: #{tpu_custom_call.1} parent=1 // pred_check_branch
      %19 = sbr.rel (0) target = $region17
    $region16: #{tpu_custom_call.1} parent=1 // pred_region
      _
    $region17: #{tpu_custom_call.1} parent=1 // pred_fallthru
      _
    // Predicated region
    $region18: #{tpu_custom_call.1} parent=1 // pred_check
      _
    $region19: #{tpu_custom_call.1} parent=1 // pred_check_branch
      %21 = sbr.rel (0) target = $region21
    $region20: #{tpu_custom_call.1} parent=1 // pred_region
      _
    $region21: #{tpu_custom_call.1} parent=1 // pred_fallthru
      _
    %v22 = vld [vmem:[%s1] sm:$0xff]
    %v23 = vld [vmem:[%s1 + $0x8] sm:$0xff]
    %v24 = vld [vmem:[%s1 + $0x10] sm:$0xff]
    %v25 = vld [vmem:[%s1 + $0x18] sm:$0xff]
    %v26 = vld [vmem:[%s1 + $0x20] sm:$0xff]
    %v27 = vld [vmem:[%s1 + $0x28] sm:$0xff]
    %v28 = vld [vmem:[%s1 + $0x30] sm:$0xff]
    %v29 = vld [vmem:[%s1 + $0x38] sm:$0xff]
    %v30 = vld [vmem:[%s1 + $0x40] sm:$0xff]
    %v31 = vld [vmem:[%s1 + $0x48] sm:$0xff]
    %v32 = vld [vmem:[%s1 + $0x50] sm:$0xff]
    %v33 = vld [vmem:[%s1 + $0x58] sm:$0xff]
    %v34 = vld [vmem:[%s1 + $0x60] sm:$0xff]
    %v35 = vld [vmem:[%s1 + $0x68] sm:$0xff]
    %v36 = vld [vmem:[%s1 + $0x70] sm:$0xff]
    %v37 = vld [vmem:[%s1 + $0x78] sm:$0xff]
    %v38 = vld [vmem:[%s1 + $0x80] sm:$0xff]
    %v39 = vld [vmem:[%s1 + $0x88] sm:$0xff]
    %v40 = vld [vmem:[%s1 + $0x90] sm:$0xff]
    %v41 = vld [vmem:[%s1 + $0x98] sm:$0xff]
    %v42 = vld [vmem:[%s1 + $0xa0] sm:$0xff]
    %v43 = vld [vmem:[%s1 + $0xa8] sm:$0xff]
    %v44 = vld [vmem:[%s1 + $0xb0] sm:$0xff]
    %v45 = vld [vmem:[%s1 + $0xb8] sm:$0xff]
    %v46 = vld [vmem:[%s1 + $0xc0] sm:$0xff]
    %v47 = vld [vmem:[%s1 + $0xc8] sm:$0xff]
    %v48 = vld [vmem:[%s1 + $0xd0] sm:$0xff]
    %v49 = vld [vmem:[%s1 + $0xd8] sm:$0xff]
    %v50 = vld [vmem:[%s1 + $0xe0] sm:$0xff]
    %v51 = vld [vmem:[%s1 + $0xe8] sm:$0xff]
    %v52 = vld [vmem:[%s1 + $0xf0] sm:$0xff]
    %v53 = vld [vmem:[%s1 + $0xf8] sm:$0xff]
    %v54 = vld [vmem:[%s1 + $0x100] sm:$0xff]
    %v55 = vld [vmem:[%s1 + $0x108] sm:$0xff]
    %v56 = vld [vmem:[%s1 + $0x110] sm:$0xff]
    %v57 = vld [vmem:[%s1 + $0x118] sm:$0xff]
    %v58 = vld [vmem:[%s1 + $0x120] sm:$0xff]
    %v59 = vld [vmem:[%s1 + $0x128] sm:$0xff]
    %v60 = vld [vmem:[%s1 + $0x130] sm:$0xff]
    %v61 = vld [vmem:[%s1 + $0x138] sm:$0xff]
    %v62 = vld [vmem:[%s1 + $0x140] sm:$0xff]
    %v63 = vld [vmem:[%s1 + $0x148] sm:$0xff]
    %v64 = vld [vmem:[%s1 + $0x150] sm:$0xff]
    %v65 = vld [vmem:[%s1 + $0x158] sm:$0xff]
    %v66 = vld [vmem:[%s1 + $0x160] sm:$0xff]
    %v67 = vld [vmem:[%s1 + $0x168] sm:$0xff]
    %v68 = vld [vmem:[%s1 + $0x170] sm:$0xff]
    %v69 = vld [vmem:[%s1 + $0x178] sm:$0xff]
    %v70 = vld [vmem:[%s1 + $0x180] sm:$0xff]
    %v71 = vld [vmem:[%s1 + $0x188] sm:$0xff]
    %v72 = vld [vmem:[%s1 + $0x190] sm:$0xff]
    %v73 = vld [vmem:[%s1 + $0x198] sm:$0xff]
    %v74 = vld [vmem:[%s1 + $0x1a0] sm:$0xff]
    %v75 = vld [vmem:[%s1 + $0x1a8] sm:$0xff]
    %v76 = vld [vmem:[%s1 + $0x1b0] sm:$0xff]
    %v77 = vld [vmem:[%s1 + $0x1b8] sm:$0xff]
    %v78 = vld [vmem:[%s1 + $0x1c0] sm:$0xff]
    %v79 = vld [vmem:[%s1 + $0x1c8] sm:$0xff]
    %v80 = vld [vmem:[%s1 + $0x1d0] sm:$0xff]
    %v81 = vld [vmem:[%s1 + $0x1d8] sm:$0xff]
    %v82 = vld [vmem:[%s1 + $0x1e0] sm:$0xff]
    %v83 = vld [vmem:[%s1 + $0x1e8] sm:$0xff]
    %v84 = vld [vmem:[%s1 + $0x1f0] sm:$0xff]
    %v85 = vld [vmem:[%s1 + $0x1f8] sm:$0xff]
    %v86 = vld [vmem:[%s0] sm:$0x3f]
    %v87 = vld [vmem:[%s2] sm:$0xff]
    %v88 = vld [vmem:[%s2 + $0x8] sm:$0xff]
    %v89 = vld [vmem:[%s2 + $0x10] sm:$0xff]
    %v90 = vld [vmem:[%s2 + $0x18] sm:$0xff]
    %v91 = vld [vmem:[%s2 + $0x20] sm:$0xff]
    %v92 = vld [vmem:[%s2 + $0x28] sm:$0xff]
    %v93 = vld [vmem:[%s2 + $0x30] sm:$0xff]
    %v94 = vld [vmem:[%s2 + $0x38] sm:$0xff]
    %v95 = vld [vmem:[%s2 + $0x40] sm:$0xff]
    %v96 = vld [vmem:[%s2 + $0x48] sm:$0xff]
    %v97 = vld [vmem:[%s2 + $0x50] sm:$0xff]
    %v98 = vld [vmem:[%s2 + $0x58] sm:$0xff]
    %v99 = vld [vmem:[%s2 + $0x60] sm:$0xff]
    %v100 = vld [vmem:[%s2 + $0x68] sm:$0xff]
    %v101 = vld [vmem:[%s2 + $0x70] sm:$0xff]
    %v102 = vld [vmem:[%s2 + $0x78] sm:$0xff]
    %v103 = vld [vmem:[%s2 + $0x80] sm:$0xff]
    %v104 = vld [vmem:[%s2 + $0x88] sm:$0xff]
    %v105 = vld [vmem:[%s2 + $0x90] sm:$0xff]
    %v106 = vld [vmem:[%s2 + $0x98] sm:$0xff]
    %v107 = vld [vmem:[%s2 + $0xa0] sm:$0xff]
    %v108 = vld [vmem:[%s2 + $0xa8] sm:$0xff]
    %v109 = vld [vmem:[%s2 + $0xb0] sm:$0xff]
    %v110 = vld [vmem:[%s2 + $0xb8] sm:$0xff]
    %v111 = vld [vmem:[%s2 + $0xc0] sm:$0xff]
    %v112 = vld [vmem:[%s2 + $0xc8] sm:$0xff]
    %v113 = vld [vmem:[%s2 + $0xd0] sm:$0xff]
    %v114 = vld [vmem:[%s2 + $0xd8] sm:$0xff]
    %v115 = vld [vmem:[%s2 + $0xe0] sm:$0xff]
    %v116 = vld [vmem:[%s2 + $0xe8] sm:$0xff]
    %v117 = vld [vmem:[%s2 + $0xf0] sm:$0xff]
    %v118 = vld [vmem:[%s2 + $0xf8] sm:$0xff]
    %v119 = vld [vmem:[%s2 + $0x100] sm:$0xff]
    %v120 = vld [vmem:[%s2 + $0x108] sm:$0xff]
    %v121 = vld [vmem:[%s2 + $0x110] sm:$0xff]
    %v122 = vld [vmem:[%s2 + $0x118] sm:$0xff]
    %v123 = vld [vmem:[%s2 + $0x120] sm:$0xff]
    %v124 = vld [vmem:[%s2 + $0x128] sm:$0xff]
    %v125 = vld [vmem:[%s2 + $0x130] sm:$0xff]
    %v126 = vld [vmem:[%s2 + $0x138] sm:$0xff]
    %v127 = vld [vmem:[%s2 + $0x140] sm:$0xff]
    %v128 = vld [vmem:[%s2 + $0x148] sm:$0xff]
    %v129 = vld [vmem:[%s2 + $0x150] sm:$0xff]
    %v130 = vld [vmem:[%s2 + $0x158] sm:$0xff]
    %v131 = vld [vmem:[%s2 + $0x160] sm:$0xff]
    %v132 = vld [vmem:[%s2 + $0x168] sm:$0xff]
    %v133 = vld [vmem:[%s2 + $0x170] sm:$0xff]
    %v134 = vld [vmem:[%s2 + $0x178] sm:$0xff]
    %v135 = vld [vmem:[%s2 + $0x180] sm:$0xff]
    %v136 = vld [vmem:[%s2 + $0x188] sm:$0xff]
    %v137 = vld [vmem:[%s2 + $0x190] sm:$0xff]
    %v138 = vld [vmem:[%s2 + $0x198] sm:$0xff]
    %v139 = vld [vmem:[%s2 + $0x1a0] sm:$0xff]
    %v140 = vld [vmem:[%s2 + $0x1a8] sm:$0xff]
    %v141 = vld [vmem:[%s2 + $0x1b0] sm:$0xff]
    %v142 = vld [vmem:[%s2 + $0x1b8] sm:$0xff]
    %v143 = vld [vmem:[%s2 + $0x1c0] sm:$0xff]
    %v144 = vld [vmem:[%s2 + $0x1c8] sm:$0xff]
    %v145 = vld [vmem:[%s2 + $0x1d0] sm:$0xff]
    %v146 = vld [vmem:[%s2 + $0x1d8] sm:$0xff]
    %v147 = vld [vmem:[%s2 + $0x1e0] sm:$0xff]
    %v148 = vld [vmem:[%s2 + $0x1e8] sm:$0xff]
    %v149 = vld [vmem:[%s2 + $0x1f0] sm:$0xff]
    %v150 = vld [vmem:[%s2 + $0x1f8] sm:$0xff]
    %152 = vset.pattern.permute.xlu0 0
    %153 = vperm.xlu0 %152, %v87
    %v154 = vpop.permute.xlu0 %153
    %157 = vset.pattern.permute.xlu0 0
    %158 = vperm.xlu0 %157, %v88
    %v159 = vpop.permute.xlu0 %158
    %162 = vset.pattern.permute.xlu0 0
    %163 = vperm.xlu0 %162, %v89
    %v164 = vpop.permute.xlu0 %163
    %167 = vset.pattern.permute.xlu0 0
    %168 = vperm.xlu0 %167, %v90
    %v169 = vpop.permute.xlu0 %168
    %172 = vset.pattern.permute.xlu0 0
    %173 = vperm.xlu0 %172, %v91
    %v174 = vpop.permute.xlu0 %173
    %177 = vset.pattern.permute.xlu0 0
    %178 = vperm.xlu0 %177, %v92
    %v179 = vpop.permute.xlu0 %178
    %182 = vset.pattern.permute.xlu0 0
    %183 = vperm.xlu0 %182, %v93
    %v184 = vpop.permute.xlu0 %183
    %187 = vset.pattern.permute.xlu0 0
    %188 = vperm.xlu0 %187, %v94
    %v189 = vpop.permute.xlu0 %188
    %192 = vset.pattern.permute.xlu0 0
    %193 = vperm.xlu0 %192, %v95
    %v194 = vpop.permute.xlu0 %193
    %197 = vset.pattern.permute.xlu0 0
    %198 = vperm.xlu0 %197, %v96
    %v199 = vpop.permute.xlu0 %198
    %202 = vset.pattern.permute.xlu0 0
    %203 = vperm.xlu0 %202, %v97
    %v204 = vpop.permute.xlu0 %203
    %207 = vset.pattern.permute.xlu0 0
    %208 = vperm.xlu0 %207, %v98
    %v209 = vpop.permute.xlu0 %208
    %212 = vset.pattern.permute.xlu0 0
    %213 = vperm.xlu0 %212, %v99
    %v214 = vpop.permute.xlu0 %213
    %217 = vset.pattern.permute.xlu0 0
    %218 = vperm.xlu0 %217, %v100
    %v219 = vpop.permute.xlu0 %218
    %222 = vset.pattern.permute.xlu0 0
    %223 = vperm.xlu0 %222, %v101
    %v224 = vpop.permute.xlu0 %223
    %227 = vset.pattern.permute.xlu0 0
    %228 = vperm.xlu0 %227, %v102
    %v229 = vpop.permute.xlu0 %228
    %232 = vset.pattern.permute.xlu0 0
    %233 = vperm.xlu0 %232, %v103
    %v234 = vpop.permute.xlu0 %233
    %237 = vset.pattern.permute.xlu0 0
    %238 = vperm.xlu0 %237, %v104
    %v239 = vpop.permute.xlu0 %238
    %242 = vset.pattern.permute.xlu0 0
    %243 = vperm.xlu0 %242, %v105
    %v244 = vpop.permute.xlu0 %243
    %247 = vset.pattern.permute.xlu0 0
    %248 = vperm.xlu0 %247, %v106
    %v249 = vpop.permute.xlu0 %248
    %252 = vset.pattern.permute.xlu0 0
    %253 = vperm.xlu0 %252, %v107
    %v254 = vpop.permute.xlu0 %253
    %257 = vset.pattern.permute.xlu0 0
    %258 = vperm.xlu0 %257, %v108
    %v259 = vpop.permute.xlu0 %258
    %262 = vset.pattern.permute.xlu0 0
    %263 = vperm.xlu0 %262, %v109
    %v264 = vpop.permute.xlu0 %263
    %267 = vset.pattern.permute.xlu0 0
    %268 = vperm.xlu0 %267, %v110
    %v269 = vpop.permute.xlu0 %268
    %272 = vset.pattern.permute.xlu0 0
    %273 = vperm.xlu0 %272, %v111
    %v274 = vpop.permute.xlu0 %273
    %277 = vset.pattern.permute.xlu0 0
    %278 = vperm.xlu0 %277, %v112
    %v279 = vpop.permute.xlu0 %278
    %282 = vset.pattern.permute.xlu0 0
    %283 = vperm.xlu0 %282, %v113
    %v284 = vpop.permute.xlu0 %283
    %287 = vset.pattern.permute.xlu0 0
    %288 = vperm.xlu0 %287, %v114
    %v289 = vpop.permute.xlu0 %288
    %292 = vset.pattern.permute.xlu0 0
    %293 = vperm.xlu0 %292, %v115
    %v294 = vpop.permute.xlu0 %293
    %297 = vset.pattern.permute.xlu0 0
    %298 = vperm.xlu0 %297, %v116
    %v299 = vpop.permute.xlu0 %298
    %302 = vset.pattern.permute.xlu0 0
    %303 = vperm.xlu0 %302, %v117
    %v304 = vpop.permute.xlu0 %303
    %307 = vset.pattern.permute.xlu0 0
    %308 = vperm.xlu0 %307, %v118
    %v309 = vpop.permute.xlu0 %308
    %312 = vset.pattern.permute.xlu0 0
    %313 = vperm.xlu0 %312, %v119
    %v314 = vpop.permute.xlu0 %313
    %317 = vset.pattern.permute.xlu0 0
    %318 = vperm.xlu0 %317, %v120
    %v319 = vpop.permute.xlu0 %318
    %322 = vset.pattern.permute.xlu0 0
    %323 = vperm.xlu0 %322, %v121
    %v324 = vpop.permute.xlu0 %323
    %327 = vset.pattern.permute.xlu0 0
    %328 = vperm.xlu0 %327, %v122
    %v329 = vpop.permute.xlu0 %328
    %332 = vset.pattern.permute.xlu0 0
    %333 = vperm.xlu0 %332, %v123
    %v334 = vpop.permute.xlu0 %333
    %337 = vset.pattern.permute.xlu0 0
    %338 = vperm.xlu0 %337, %v124
    %v339 = vpop.permute.xlu0 %338
    %342 = vset.pattern.permute.xlu0 0
    %343 = vperm.xlu0 %342, %v125
    %v344 = vpop.permute.xlu0 %343
    %347 = vset.pattern.permute.xlu0 0
    %348 = vperm.xlu0 %347, %v126
    %v349 = vpop.permute.xlu0 %348
    %352 = vset.pattern.permute.xlu0 0
    %353 = vperm.xlu0 %352, %v127
    %v354 = vpop.permute.xlu0 %353
    %357 = vset.pattern.permute.xlu0 0
    %358 = vperm.xlu0 %357, %v128
    %v359 = vpop.permute.xlu0 %358
    %362 = vset.pattern.permute.xlu0 0
    %363 = vperm.xlu0 %362, %v129
    %v364 = vpop.permute.xlu0 %363
    %367 = vset.pattern.permute.xlu0 0
    %368 = vperm.xlu0 %367, %v130
    %v369 = vpop.permute.xlu0 %368
    %372 = vset.pattern.permute.xlu0 0
    %373 = vperm.xlu0 %372, %v131
    %v374 = vpop.permute.xlu0 %373
    %377 = vset.pattern.permute.xlu0 0
    %378 = vperm.xlu0 %377, %v132
    %v379 = vpop.permute.xlu0 %378
    %382 = vset.pattern.permute.xlu0 0
    %383 = vperm.xlu0 %382, %v133
    %v384 = vpop.permute.xlu0 %383
    %387 = vset.pattern.permute.xlu0 0
    %388 = vperm.xlu0 %387, %v134
    %v389 = vpop.permute.xlu0 %388
    %392 = vset.pattern.permute.xlu0 0
    %393 = vperm.xlu0 %392, %v135
    %v394 = vpop.permute.xlu0 %393
    %397 = vset.pattern.permute.xlu0 0
    %398 = vperm.xlu0 %397, %v136
    %v399 = vpop.permute.xlu0 %398
    %402 = vset.pattern.permute.xlu0 0
    %403 = vperm.xlu0 %402, %v137
    %v404 = vpop.permute.xlu0 %403
    %407 = vset.pattern.permute.xlu0 0
    %408 = vperm.xlu0 %407, %v138
    %v409 = vpop.permute.xlu0 %408
    %412 = vset.pattern.permute.xlu0 0
    %413 = vperm.xlu0 %412, %v139
    %v414 = vpop.permute.xlu0 %413
    %417 = vset.pattern.permute.xlu0 0
    %418 = vperm.xlu0 %417, %v140
    %v419 = vpop.permute.xlu0 %418
    %422 = vset.pattern.permute.xlu0 0
    %423 = vperm.xlu0 %422, %v141
    %v424 = vpop.permute.xlu0 %423
    %427 = vset.pattern.permute.xlu0 0
    %428 = vperm.xlu0 %427, %v142
    %v429 = vpop.permute.xlu0 %428
    %432 = vset.pattern.permute.xlu0 0
    %433 = vperm.xlu0 %432, %v143
    %v434 = vpop.permute.xlu0 %433
    %437 = vset.pattern.permute.xlu0 0
    %438 = vperm.xlu0 %437, %v144
    %v439 = vpop.permute.xlu0 %438
    %442 = vset.pattern.permute.xlu0 0
    %443 = vperm.xlu0 %442, %v145
    %v444 = vpop.permute.xlu0 %443
    %447 = vset.pattern.permute.xlu0 0
    %448 = vperm.xlu0 %447, %v146
    %v449 = vpop.permute.xlu0 %448
    %452 = vset.pattern.permute.xlu0 0
    %453 = vperm.xlu0 %452, %v147
    %v454 = vpop.permute.xlu0 %453
    %457 = vset.pattern.permute.xlu0 0
    %458 = vperm.xlu0 %457, %v148
    %v459 = vpop.permute.xlu0 %458
    %462 = vset.pattern.permute.xlu0 0
    %463 = vperm.xlu0 %462, %v149
    %v464 = vpop.permute.xlu0 %463
    %467 = vset.pattern.permute.xlu0 0
    %468 = vperm.xlu0 %467, %v150
    %v469 = vpop.permute.xlu0 %468
    %vm471 = vcmask 48128
    %v473 = vsel %vm471, %v22, 0
    %v476 = vsel %vm471, %v23, 0
    %v479 = vsel %vm471, %v24, 0
    %v482 = vsel %vm471, %v25, 0
    %v485 = vsel %vm471, %v26, 0
    %v488 = vsel %vm471, %v27, 0
    %v491 = vsel %vm471, %v28, 0
    %v494 = vsel %vm471, %v29, 0
    %v497 = vsel %vm471, %v30, 0
    %v500 = vsel %vm471, %v31, 0
    %v503 = vsel %vm471, %v32, 0
    %v506 = vsel %vm471, %v33, 0
    %v509 = vsel %vm471, %v34, 0
    %v512 = vsel %vm471, %v35, 0
    %v515 = vsel %vm471, %v36, 0
    %v518 = vsel %vm471, %v37, 0
    %v521 = vsel %vm471, %v38, 0
    %v524 = vsel %vm471, %v39, 0
    %v527 = vsel %vm471, %v40, 0
    %v530 = vsel %vm471, %v41, 0
    %v533 = vsel %vm471, %v42, 0
    %v536 = vsel %vm471, %v43, 0
    %v539 = vsel %vm471, %v44, 0
    %v542 = vsel %vm471, %v45, 0
    %v545 = vsel %vm471, %v46, 0
    %v548 = vsel %vm471, %v47, 0
    %v551 = vsel %vm471, %v48, 0
    %v554 = vsel %vm471, %v49, 0
    %v557 = vsel %vm471, %v50, 0
    %v560 = vsel %vm471, %v51, 0
    %v563 = vsel %vm471, %v52, 0
    %v566 = vsel %vm471, %v53, 0
    %v569 = vsel %vm471, %v54, 0
    %v572 = vsel %vm471, %v55, 0
    %v575 = vsel %vm471, %v56, 0
    %v578 = vsel %vm471, %v57, 0
    %v581 = vsel %vm471, %v58, 0
    %v584 = vsel %vm471, %v59, 0
    %v587 = vsel %vm471, %v60, 0
    %v590 = vsel %vm471, %v61, 0
    %v593 = vsel %vm471, %v62, 0
    %v596 = vsel %vm471, %v63, 0
    %v599 = vsel %vm471, %v64, 0
    %v602 = vsel %vm471, %v65, 0
    %v605 = vsel %vm471, %v66, 0
    %v608 = vsel %vm471, %v67, 0
    %v611 = vsel %vm471, %v68, 0
    %v614 = vsel %vm471, %v69, 0
    %v617 = vsel %vm471, %v70, 0
    %v620 = vsel %vm471, %v71, 0
    %v623 = vsel %vm471, %v72, 0
    %v626 = vsel %vm471, %v73, 0
    %v629 = vsel %vm471, %v74, 0
    %v632 = vsel %vm471, %v75, 0
    %v635 = vsel %vm471, %v76, 0
    %v638 = vsel %vm471, %v77, 0
    %v641 = vsel %vm471, %v78, 0
    %v644 = vsel %vm471, %v79, 0
    %v647 = vsel %vm471, %v80, 0
    %v650 = vsel %vm471, %v81, 0
    %v653 = vsel %vm471, %v82, 0
    %v656 = vsel %vm471, %v83, 0
    %v659 = vsel %vm471, %v84, 0
    %v662 = vsel %vm471, %v85, 0
    %vm664 = vcmask 1045504
    %v666 = vsel %vm664, %v86, 0
    %668 = vmatprep.subr.mxu0 0.0
    %669 = vmatpush1.msra.mxu0 %v666
    %670 = vmatprep.subr.mxu0 0.0
    %671 = vmatpush1.msra.mxu0 0.0
    %672 = vmatprep.subr.mxu0 0.0
    %673 = vmatpush1.msra.mxu0 0.0
    %674 = vmatprep.subr.mxu0 0.0
    %675 = vmatpush1.msra.mxu0 0.0
    %676 = vmatprep.subr.mxu0 0.0
    %677 = vmatpush1.msra.mxu0 0.0
    %678 = vmatprep.subr.mxu0 0.0
    %679 = vmatpush1.msra.mxu0 0.0
    %680 = vmatprep.subr.mxu0 0.0
    %681 = vmatpush1.msra.mxu0 0.0
    %682 = vmatprep.subr.mxu0 0.0
    %683 = vmatpush1.msra.mxu0 0.0
    %684 = vmatprep.subr.mxu0 0.0
    %685 = vmatpush1.msra.mxu0 0.0
    %686 = vmatprep.subr.mxu0 0.0
    %687 = vmatpush1.msra.mxu0 0.0
    %688 = vmatprep.subr.mxu0 0.0
    %689 = vmatpush1.msra.mxu0 0.0
    %690 = vmatprep.subr.mxu0 0.0
    %691 = vmatpush1.msra.mxu0 0.0
    %692 = vmatprep.subr.mxu0 0.0
    %693 = vmatpush1.msra.mxu0 0.0
    %694 = vmatprep.subr.mxu0 0.0
    %695 = vmatpush1.msra.mxu0 0.0
    %696 = vmatprep.subr.mxu0 0.0
    %697 = vmatpush1.msra.mxu0 0.0
    %698 = vmatprep.subr.mxu0 0.0
    %699 = vmatpush1.msra.mxu0 0.0
    %700 = vmatprep.subr.mxu0 0.0
    %701 = vmatpush1.msra.mxu0 0.0
    %702 = vmatprep.subr.mxu0 0.0
    %703 = vmatpush1.msra.mxu0 0.0
    %704 = vmatprep.subr.mxu0 0.0
    %705 = vmatpush1.msra.mxu0 0.0
    %706 = vmatprep.subr.mxu0 0.0
    %707 = vmatpush1.msra.mxu0 0.0
    %708 = vmatprep.subr.mxu0 0.0
    %709 = vmatpush1.msra.mxu0 0.0
    %710 = vmatprep.subr.mxu0 0.0
    %711 = vmatpush1.msra.mxu0 0.0
    %712 = vmatprep.subr.mxu0 0.0
    %713 = vmatpush1.msra.mxu0 0.0
    %714 = vmatprep.subr.mxu0 0.0
    %715 = vmatpush1.msra.mxu0 0.0
    %716 = vmatprep.subr.mxu0 0.0
    %717 = vmatpush1.msra.mxu0 0.0
    %718 = vmatprep.subr.mxu0 0.0
    %719 = vmatpush1.msra.mxu0 0.0
    %720 = vmatprep.subr.mxu0 0.0
    %721 = vmatpush1.msra.mxu0 0.0
    %722 = vmatprep.subr.mxu0 0.0
    %723 = vmatpush1.msra.mxu0 0.0
    %724 = vmatprep.subr.mxu0 0.0
    %725 = vmatpush1.msra.mxu0 0.0
    %726 = vmatprep.subr.mxu0 0.0
    %727 = vmatpush1.msra.mxu0 0.0
    %728 = vmatprep.subr.mxu0 0.0
    %729 = vmatpush1.msra.mxu0 0.0
    %730 = vmatprep.subr.mxu0 0.0
    %731 = vmatpush1.msra.mxu0 0.0
    %732 = vmatprep.mubr.f32.mxu0 0.0
    %733 = vmatmul.mubr.f32.gmra.mrb[0].mxu0 %v473
    %v734 = vpop.f32.mrb[0].mxu0
    %v735 = vadd.f32 %v154, %v734
    %v736 = vpop.f32.mrb[0].mxu0
    %737 = vmatprep.mubr.f32.mxu0 0.0
    %738 = vmatmul.mubr.f32.gmra.mrb[0].mxu0 %v476
    %v739 = vpop.f32.mrb[0].mxu0
    %v740 = vadd.f32 %v159, %v739
    %v741 = vpop.f32.mrb[0].mxu0
    %742 = vmatprep.mubr.f32.mxu0 0.0
    %743 = vmatmul.mubr.f32.gmra.mrb[0].mxu0 %v479
    %v744 = vpop.f32.mrb[0].mxu0
    %v745 = vadd.f32 %v164, %v744
    %v746 = vpop.f32.mrb[0].mxu0
    %747 = vmatprep.mubr.f32.mxu0 0.0
    %748 = vmatmul.mubr.f32.gmra.mrb[0].mxu0 %v482
    %v749 = vpop.f32.mrb[0].mxu0
    %v750 = vadd.f32 %v169, %v749
    %v751 = vpop.f32.mrb[0].mxu0
    %752 = vmatprep.mubr.f32.mxu0 0.0
    %753 = vmatmul.mubr.f32.gmra.mrb[0].mxu0 %v485
    %v754 = vpop.f32.mrb[0].mxu0
    %v755 = vadd.f32 %v174, %v754
    %v756 = vpop.f32.mrb[0].mxu0
    %757 = vmatprep.mubr.f32.mxu0 0.0
    %758 = vmatmul.mubr.f32.gmra.mrb[0].mxu0 %v488
    %v759 = vpop.f32.mrb[0].mxu0
    %v760 = vadd.f32 %v179, %v759
    %v761 = vpop.f32.mrb[0].mxu0
    %762 = vmatprep.mubr.f32.mxu0 0.0
    %763 = vmatmul.mubr.f32.gmra.mrb[0].mxu0 %v491
    %v764 = vpop.f32.mrb[0].mxu0
    %v765 = vadd.f32 %v184, %v764
    %v766 = vpop.f32.mrb[0].mxu0
    %767 = vmatprep.mubr.f32.mxu0 0.0
    %768 = vmatmul.mubr.f32.gmra.mrb[0].mxu0 %v494
    %v769 = vpop.f32.mrb[0].mxu0
    %v770 = vadd.f32 %v189, %v769
    %v771 = vpop.f32.mrb[0].mxu0
    %772 = vmatprep.mubr.f32.mxu0 0.0
    %773 = vmatmul.mubr.f32.gmra.mrb[0].mxu0 %v497
    %v774 = vpop.f32.mrb[0].mxu0
    %v775 = vadd.f32 %v194, %v774
    %v776 = vpop.f32.mrb[0].mxu0
    %777 = vmatprep.mubr.f32.mxu0 0.0
    %778 = vmatmul.mubr.f32.gmra.mrb[0].mxu0 %v500
    %v779 = vpop.f32.mrb[0].mxu0
    %v780 = vadd.f32 %v199, %v779
    %v781 = vpop.f32.mrb[0].mxu0
    %782 = vmatprep.mubr.f32.mxu0 0.0
    %783 = vmatmul.mubr.f32.gmra.mrb[0].mxu0 %v503
    %v784 = vpop.f32.mrb[0].mxu0
    %v785 = vadd.f32 %v204, %v784
    %v786 = vpop.f32.mrb[0].mxu0
    %787 = vmatprep.mubr.f32.mxu0 0.0
    %788 = vmatmul.mubr.f32.gmra.mrb[0].mxu0 %v506
    %v789 = vpop.f32.mrb[0].mxu0
    %v790 = vadd.f32 %v209, %v789
    %v791 = vpop.f32.mrb[0].mxu0
    %792 = vmatprep.mubr.f32.mxu0 0.0
    %793 = vmatmul.mubr.f32.gmra.mrb[0].mxu0 %v509
    %v794 = vpop.f32.mrb[0].mxu0
    %v795 = vadd.f32 %v214, %v794
    %v796 = vpop.f32.mrb[0].mxu0
    %797 = vmatprep.mubr.f32.mxu0 0.0
    %798 = vmatmul.mubr.f32.gmra.mrb[0].mxu0 %v512
    %v799 = vpop.f32.mrb[0].mxu0
    %v800 = vadd.f32 %v219, %v799
    %v801 = vpop.f32.mrb[0].mxu0
    %802 = vmatprep.mubr.f32.mxu0 0.0
    %803 = vmatmul.mubr.f32.gmra.mrb[0].mxu0 %v515
    %v804 = vpop.f32.mrb[0].mxu0
    %v805 = vadd.f32 %v224, %v804
    %v806 = vpop.f32.mrb[0].mxu0
    %807 = vmatprep.mubr.f32.mxu0 0.0
    %808 = vmatmul.mubr.f32.gmra.mrb[0].mxu0 %v518
    %v809 = vpop.f32.mrb[0].mxu0
    %v810 = vadd.f32 %v229, %v809
    %v811 = vpop.f32.mrb[0].mxu0
    %812 = vmatprep.mubr.f32.mxu0 0.0
    %813 = vmatmul.mubr.f32.gmra.mrb[0].mxu0 %v521
    %v814 = vpop.f32.mrb[0].mxu0
    %v815 = vadd.f32 %v234, %v814
    %v816 = vpop.f32.mrb[0].mxu0
    %817 = vmatprep.mubr.f32.mxu0 0.0
    %818 = vmatmul.mubr.f32.gmra.mrb[0].mxu0 %v524
    %v819 = vpop.f32.mrb[0].mxu0
    %v820 = vadd.f32 %v239, %v819
    %v821 = vpop.f32.mrb[0].mxu0
    %822 = vmatprep.mubr.f32.mxu0 0.0
    %823 = vmatmul.mubr.f32.gmra.mrb[0].mxu0 %v527
    %v824 = vpop.f32.mrb[0].mxu0
    %v825 = vadd.f32 %v244, %v824
    %v826 = vpop.f32.mrb[0].mxu0
    %827 = vmatprep.mubr.f32.mxu0 0.0
    %828 = vmatmul.mubr.f32.gmra.mrb[0].mxu0 %v530
    %v829 = vpop.f32.mrb[0].mxu0
    %v830 = vadd.f32 %v249, %v829
    %v831 = vpop.f32.mrb[0].mxu0
    %832 = vmatprep.mubr.f32.mxu0 0.0
    %833 = vmatmul.mubr.f32.gmra.mrb[0].mxu0 %v533
    %v834 = vpop.f32.mrb[0].mxu0
    %v835 = vadd.f32 %v254, %v834
    %v836 = vpop.f32.mrb[0].mxu0
    %837 = vmatprep.mubr.f32.mxu0 0.0
    %838 = vmatmul.mubr.f32.gmra.mrb[0].mxu0 %v536
    %v839 = vpop.f32.mrb[0].mxu0
    %v840 = vadd.f32 %v259, %v839
    %v841 = vpop.f32.mrb[0].mxu0
    %842 = vmatprep.mubr.f32.mxu0 0.0
    %843 = vmatmul.mubr.f32.gmra.mrb[0].mxu0 %v539
    %v844 = vpop.f32.mrb[0].mxu0
    %v845 = vadd.f32 %v264, %v844
    %v846 = vpop.f32.mrb[0].mxu0
    %847 = vmatprep.mubr.f32.mxu0 0.0
    %848 = vmatmul.mubr.f32.gmra.mrb[0].mxu0 %v542
    %v849 = vpop.f32.mrb[0].mxu0
    %v850 = vadd.f32 %v269, %v849
    %v851 = vpop.f32.mrb[0].mxu0
    %852 = vmatprep.mubr.f32.mxu0 0.0
    %853 = vmatmul.mubr.f32.gmra.mrb[0].mxu0 %v545
    %v854 = vpop.f32.mrb[0].mxu0
    %v855 = vadd.f32 %v274, %v854
    %v856 = vpop.f32.mrb[0].mxu0
    %857 = vmatprep.mubr.f32.mxu0 0.0
    %858 = vmatmul.mubr.f32.gmra.mrb[0].mxu0 %v548
    %v859 = vpop.f32.mrb[0].mxu0
    %v860 = vadd.f32 %v279, %v859
    %v861 = vpop.f32.mrb[0].mxu0
    %862 = vmatprep.mubr.f32.mxu0 0.0
    %863 = vmatmul.mubr.f32.gmra.mrb[0].mxu0 %v551
    %v864 = vpop.f32.mrb[0].mxu0
    %v865 = vadd.f32 %v284, %v864
    %v866 = vpop.f32.mrb[0].mxu0
    %867 = vmatprep.mubr.f32.mxu0 0.0
    %868 = vmatmul.mubr.f32.gmra.mrb[0].mxu0 %v554
    %v869 = vpop.f32.mrb[0].mxu0
    %v870 = vadd.f32 %v289, %v869
    %v871 = vpop.f32.mrb[0].mxu0
    %872 = vmatprep.mubr.f32.mxu0 0.0
    %873 = vmatmul.mubr.f32.gmra.mrb[0].mxu0 %v557
    %v874 = vpop.f32.mrb[0].mxu0
    %v875 = vadd.f32 %v294, %v874
    %v876 = vpop.f32.mrb[0].mxu0
    %877 = vmatprep.mubr.f32.mxu0 0.0
    %878 = vmatmul.mubr.f32.gmra.mrb[0].mxu0 %v560
    %v879 = vpop.f32.mrb[0].mxu0
    %v880 = vadd.f32 %v299, %v879
    %v881 = vpop.f32.mrb[0].mxu0
    %882 = vmatprep.mubr.f32.mxu0 0.0
    %883 = vmatmul.mubr.f32.gmra.mrb[0].mxu0 %v563
    %v884 = vpop.f32.mrb[0].mxu0
    %v885 = vadd.f32 %v304, %v884
    %v886 = vpop.f32.mrb[0].mxu0
    %887 = vmatprep.mubr.f32.mxu0 0.0
    %888 = vmatmul.mubr.f32.gmra.mrb[0].mxu0 %v566
    %v889 = vpop.f32.mrb[0].mxu0
    %v890 = vadd.f32 %v309, %v889
    %v891 = vpop.f32.mrb[0].mxu0
    %892 = vmatprep.mubr.f32.mxu0 0.0
    %893 = vmatmul.mubr.f32.gmra.mrb[0].mxu0 %v569
    %v894 = vpop.f32.mrb[0].mxu0
    %v895 = vadd.f32 %v314, %v894
    %v896 = vpop.f32.mrb[0].mxu0
    %897 = vmatprep.mubr.f32.mxu0 0.0
    %898 = vmatmul.mubr.f32.gmra.mrb[0].mxu0 %v572
    %v899 = vpop.f32.mrb[0].mxu0
    %v900 = vadd.f32 %v319, %v899
    %v901 = vpop.f32.mrb[0].mxu0
    %902 = vmatprep.mubr.f32.mxu0 0.0
    %903 = vmatmul.mubr.f32.gmra.mrb[0].mxu0 %v575
    %v904 = vpop.f32.mrb[0].mxu0
    %v905 = vadd.f32 %v324, %v904
    %v906 = vpop.f32.mrb[0].mxu0
    %907 = vmatprep.mubr.f32.mxu0 0.0
    %908 = vmatmul.mubr.f32.gmra.mrb[0].mxu0 %v578
    %v909 = vpop.f32.mrb[0].mxu0
    %v910 = vadd.f32 %v329, %v909
    %v911 = vpop.f32.mrb[0].mxu0
    %912 = vmatprep.mubr.f32.mxu0 0.0
    %913 = vmatmul.mubr.f32.gmra.mrb[0].mxu0 %v581
    %v914 = vpop.f32.mrb[0].mxu0
    %v915 = vadd.f32 %v334, %v914
    %v916 = vpop.f32.mrb[0].mxu0
    %917 = vmatprep.mubr.f32.mxu0 0.0
    %918 = vmatmul.mubr.f32.gmra.mrb[0].mxu0 %v584
    %v919 = vpop.f32.mrb[0].mxu0
    %v920 = vadd.f32 %v339, %v919
    %v921 = vpop.f32.mrb[0].mxu0
    %922 = vmatprep.mubr.f32.mxu0 0.0
    %923 = vmatmul.mubr.f32.gmra.mrb[0].mxu0 %v587
    %v924 = vpop.f32.mrb[0].mxu0
    %v925 = vadd.f32 %v344, %v924
    %v926 = vpop.f32.mrb[0].mxu0
    %927 = vmatprep.mubr.f32.mxu0 0.0
    %928 = vmatmul.mubr.f32.gmra.mrb[0].mxu0 %v590
    %v929 = vpop.f32.mrb[0].mxu0
    %v930 = vadd.f32 %v349, %v929
    %v931 = vpop.f32.mrb[0].mxu0
    %932 = vmatprep.mubr.f32.mxu0 0.0
    %933 = vmatmul.mubr.f32.gmra.mrb[0].mxu0 %v593
    %v934 = vpop.f32.mrb[0].mxu0
    %v935 = vadd.f32 %v354, %v934
    %v936 = vpop.f32.mrb[0].mxu0
    %937 = vmatprep.mubr.f32.mxu0 0.0
    %938 = vmatmul.mubr.f32.gmra.mrb[0].mxu0 %v596
    %v939 = vpop.f32.mrb[0].mxu0
    %v940 = vadd.f32 %v359, %v939
    %v941 = vpop.f32.mrb[0].mxu0
    %942 = vmatprep.mubr.f32.mxu0 0.0
    %943 = vmatmul.mubr.f32.gmra.mrb[0].mxu0 %v599
    %v944 = vpop.f32.mrb[0].mxu0
    %v945 = vadd.f32 %v364, %v944
    %v946 = vpop.f32.mrb[0].mxu0
    %947 = vmatprep.mubr.f32.mxu0 0.0
    %948 = vmatmul.mubr.f32.gmra.mrb[0].mxu0 %v602
    %v949 = vpop.f32.mrb[0].mxu0
    %v950 = vadd.f32 %v369, %v949
    %v951 = vpop.f32.mrb[0].mxu0
    %952 = vmatprep.mubr.f32.mxu0 0.0
    %953 = vmatmul.mubr.f32.gmra.mrb[0].mxu0 %v605
    %v954 = vpop.f32.mrb[0].mxu0
    %v955 = vadd.f32 %v374, %v954
    %v956 = vpop.f32.mrb[0].mxu0
    %957 = vmatprep.mubr.f32.mxu0 0.0
    %958 = vmatmul.mubr.f32.gmra.mrb[0].mxu0 %v608
    %v959 = vpop.f32.mrb[0].mxu0
    %v960 = vadd.f32 %v379, %v959
    %v961 = vpop.f32.mrb[0].mxu0
    %962 = vmatprep.mubr.f32.mxu0 0.0
    %963 = vmatmul.mubr.f32.gmra.mrb[0].mxu0 %v611
    %v964 = vpop.f32.mrb[0].mxu0
    %v965 = vadd.f32 %v384, %v964
    %v966 = vpop.f32.mrb[0].mxu0
    %967 = vmatprep.mubr.f32.mxu0 0.0
    %968 = vmatmul.mubr.f32.gmra.mrb[0].mxu0 %v614
    %v969 = vpop.f32.mrb[0].mxu0
    %v970 = vadd.f32 %v389, %v969
    %v971 = vpop.f32.mrb[0].mxu0
    %972 = vmatprep.mubr.f32.mxu0 0.0
    %973 = vmatmul.mubr.f32.gmra.mrb[0].mxu0 %v617
    %v974 = vpop.f32.mrb[0].mxu0
    %v975 = vadd.f32 %v394, %v974
    %v976 = vpop.f32.mrb[0].mxu0
    %977 = vmatprep.mubr.f32.mxu0 0.0
    %978 = vmatmul.mubr.f32.gmra.mrb[0].mxu0 %v620
    %v979 = vpop.f32.mrb[0].mxu0
    %v980 = vadd.f32 %v399, %v979
    %v981 = vpop.f32.mrb[0].mxu0
    %982 = vmatprep.mubr.f32.mxu0 0.0
    %983 = vmatmul.mubr.f32.gmra.mrb[0].mxu0 %v623
    %v984 = vpop.f32.mrb[0].mxu0
    %v985 = vadd.f32 %v404, %v984
    %v986 = vpop.f32.mrb[0].mxu0
    %987 = vmatprep.mubr.f32.mxu0 0.0
    %988 = vmatmul.mubr.f32.gmra.mrb[0].mxu0 %v626
    %v989 = vpop.f32.mrb[0].mxu0
    %v990 = vadd.f32 %v409, %v989
    %v991 = vpop.f32.mrb[0].mxu0
    %992 = vmatprep.mubr.f32.mxu0 0.0
    %993 = vmatmul.mubr.f32.gmra.mrb[0].mxu0 %v629
    %v994 = vpop.f32.mrb[0].mxu0
    %v995 = vadd.f32 %v414, %v994
    %v996 = vpop.f32.mrb[0].mxu0
    %997 = vmatprep.mubr.f32.mxu0 0.0
    %998 = vmatmul.mubr.f32.gmra.mrb[0].mxu0 %v632
    %v999 = vpop.f32.mrb[0].mxu0
    %v1000 = vadd.f32 %v419, %v999
    %v1001 = vpop.f32.mrb[0].mxu0
    %1002 = vmatprep.mubr.f32.mxu0 0.0
    %1003 = vmatmul.mubr.f32.gmra.mrb[0].mxu0 %v635
    %v1004 = vpop.f32.mrb[0].mxu0
    %v1005 = vadd.f32 %v424, %v1004
    %v1006 = vpop.f32.mrb[0].mxu0
    %1007 = vmatprep.mubr.f32.mxu0 0.0
    %1008 = vmatmul.mubr.f32.gmra.mrb[0].mxu0 %v638
    %v1009 = vpop.f32.mrb[0].mxu0
    %v1010 = vadd.f32 %v429, %v1009
    %v1011 = vpop.f32.mrb[0].mxu0
    %1012 = vmatprep.mubr.f32.mxu0 0.0
    %1013 = vmatmul.mubr.f32.gmra.mrb[0].mxu0 %v641
    %v1014 = vpop.f32.mrb[0].mxu0
    %v1015 = vadd.f32 %v434, %v1014
    %v1016 = vpop.f32.mrb[0].mxu0
    %1017 = vmatprep.mubr.f32.mxu0 0.0
    %1018 = vmatmul.mubr.f32.gmra.mrb[0].mxu0 %v644
    %v1019 = vpop.f32.mrb[0].mxu0
    %v1020 = vadd.f32 %v439, %v1019
    %v1021 = vpop.f32.mrb[0].mxu0
    %1022 = vmatprep.mubr.f32.mxu0 0.0
    %1023 = vmatmul.mubr.f32.gmra.mrb[0].mxu0 %v647
    %v1024 = vpop.f32.mrb[0].mxu0
    %v1025 = vadd.f32 %v444, %v1024
    %v1026 = vpop.f32.mrb[0].mxu0
    %1027 = vmatprep.mubr.f32.mxu0 0.0
    %1028 = vmatmul.mubr.f32.gmra.mrb[0].mxu0 %v650
    %v1029 = vpop.f32.mrb[0].mxu0
    %v1030 = vadd.f32 %v449, %v1029
    %v1031 = vpop.f32.mrb[0].mxu0
    %1032 = vmatprep.mubr.f32.mxu0 0.0
    %1033 = vmatmul.mubr.f32.gmra.mrb[0].mxu0 %v653
    %v1034 = vpop.f32.mrb[0].mxu0
    %v1035 = vadd.f32 %v454, %v1034
    %v1036 = vpop.f32.mrb[0].mxu0
    %1037 = vmatprep.mubr.f32.mxu0 0.0
    %1038 = vmatmul.mubr.f32.gmra.mrb[0].mxu0 %v656
    %v1039 = vpop.f32.mrb[0].mxu0
    %v1040 = vadd.f32 %v459, %v1039
    %v1041 = vpop.f32.mrb[0].mxu0
    %1042 = vmatprep.mubr.f32.mxu0 0.0
    %1043 = vmatmul.mubr.f32.gmra.mrb[0].mxu0 %v659
    %v1044 = vpop.f32.mrb[0].mxu0
    %v1045 = vadd.f32 %v464, %v1044
    %v1046 = vpop.f32.mrb[0].mxu0
    %1047 = vmatprep.mubr.f32.mxu0 0.0
    %1048 = vmatmul.mubr.f32.gmra.mrb[0].mxu0 %v662
    %v1049 = vpop.f32.mrb[0].mxu0
    %v1050 = vadd.f32 %v469, %v1049
    %v1051 = vpop.f32.mrb[0].mxu0
    %1052 = vdwg.mxu0
    %v1053 = vmax.f32 %v735, 0.0
    %v1054 = vmax.f32 %v740, 0.0
    %v1055 = vmax.f32 %v745, 0.0
    %v1056 = vmax.f32 %v750, 0.0
    %v1057 = vmax.f32 %v755, 0.0
    %v1058 = vmax.f32 %v760, 0.0
    %v1059 = vmax.f32 %v765, 0.0
    %v1060 = vmax.f32 %v770, 0.0
    %v1061 = vmax.f32 %v775, 0.0
    %v1062 = vmax.f32 %v780, 0.0
    %v1063 = vmax.f32 %v785, 0.0
    %v1064 = vmax.f32 %v790, 0.0
    %v1065 = vmax.f32 %v795, 0.0
    %v1066 = vmax.f32 %v800, 0.0
    %v1067 = vmax.f32 %v805, 0.0
    %v1068 = vmax.f32 %v810, 0.0
    %v1069 = vmax.f32 %v815, 0.0
    %v1070 = vmax.f32 %v820, 0.0
    %v1071 = vmax.f32 %v825, 0.0
    %v1072 = vmax.f32 %v830, 0.0
    %v1073 = vmax.f32 %v835, 0.0
    %v1074 = vmax.f32 %v840, 0.0
    %v1075 = vmax.f32 %v845, 0.0
    %v1076 = vmax.f32 %v850, 0.0
    %v1077 = vmax.f32 %v855, 0.0
    %v1078 = vmax.f32 %v860, 0.0
    %v1079 = vmax.f32 %v865, 0.0
    %v1080 = vmax.f32 %v870, 0.0
    %v1081 = vmax.f32 %v875, 0.0
    %v1082 = vmax.f32 %v880, 0.0
    %v1083 = vmax.f32 %v885, 0.0
    %v1084 = vmax.f32 %v890, 0.0
    %v1085 = vmax.f32 %v895, 0.0
    %v1086 = vmax.f32 %v900, 0.0
    %v1087 = vmax.f32 %v905, 0.0
    %v1088 = vmax.f32 %v910, 0.0
    %v1089 = vmax.f32 %v915, 0.0
    %v1090 = vmax.f32 %v920, 0.0
    %v1091 = vmax.f32 %v925, 0.0
    %v1092 = vmax.f32 %v930, 0.0
    %v1093 = vmax.f32 %v935, 0.0
    %v1094 = vmax.f32 %v940, 0.0
    %v1095 = vmax.f32 %v945, 0.0
    %v1096 = vmax.f32 %v950, 0.0
    %v1097 = vmax.f32 %v955, 0.0
    %v1098 = vmax.f32 %v960, 0.0
    %v1099 = vmax.f32 %v965, 0.0
    %v1100 = vmax.f32 %v970, 0.0
    %v1101 = vmax.f32 %v975, 0.0
    %v1102 = vmax.f32 %v980, 0.0
    %v1103 = vmax.f32 %v985, 0.0
    %v1104 = vmax.f32 %v990, 0.0
    %v1105 = vmax.f32 %v995, 0.0
    %v1106 = vmax.f32 %v1000, 0.0
    %v1107 = vmax.f32 %v1005, 0.0
    %v1108 = vmax.f32 %v1010, 0.0
    %v1109 = vmax.f32 %v1015, 0.0
    %v1110 = vmax.f32 %v1020, 0.0
    %v1111 = vmax.f32 %v1025, 0.0
    %v1112 = vmax.f32 %v1030, 0.0
    %v1113 = vmax.f32 %v1035, 0.0
    %v1114 = vmax.f32 %v1040, 0.0
    %v1115 = vmax.f32 %v1045, 0.0
    %v1116 = vmax.f32 %v1050, 0.0
    %v1117 = vld [vmem:[%s3] sm:$0xf]
    %s1118 = sld [smem:[#allocation2]]
    %v1119 = vstv %s1118
    %v1121 = vlaneseq
    %v1122 = vshrl.u32 %v1121, 7
    %v1123 = vsub.s32 0, %v1122
    %v1124 = vrot.slane %v1117, %v1123
    %v1125 = vlaneseq
    %v1126 = vshrl.u32 %v1125, 7
    %v1127 = vsub.s32 1, %v1126
    %v1128 = vrot.slane %v1117, %v1127
    %v1129 = vlaneseq
    %v1130 = vshrl.u32 %v1129, 7
    %v1131 = vsub.s32 2, %v1130
    %v1132 = vrot.slane %v1117, %v1131
    %v1133 = vlaneseq
    %v1134 = vshrl.u32 %v1133, 7
    %v1135 = vsub.s32 3, %v1134
    %v1136 = vrot.slane %v1117, %v1135
    %1141 = vmatprep.subr.mxu0 0.0
    %1142 = vmatpush1.msra.mxu0 %v1053
    %1143 = vmatprep.subr.mxu0 0.0
    %1144 = vmatpush1.msra.mxu0 %v1054
    %1145 = vmatprep.subr.mxu0 0.0
    %1146 = vmatpush1.msra.mxu0 %v1055
    %1147 = vmatprep.subr.mxu0 0.0
    %1148 = vmatpush1.msra.mxu0 %v1056
    %1149 = vmatprep.subr.mxu0 0.0
    %1150 = vmatpush1.msra.mxu0 %v1057
    %1151 = vmatprep.subr.mxu0 0.0
    %1152 = vmatpush1.msra.mxu0 %v1058
    %1153 = vmatprep.subr.mxu0 0.0
    %1154 = vmatpush1.msra.mxu0 %v1059
    %1155 = vmatprep.subr.mxu0 0.0
    %1156 = vmatpush1.msra.mxu0 %v1060
    %1157 = vmatprep.subr.mxu0 0.0
    %1158 = vmatpush1.msra.mxu0 %v1061
    %1159 = vmatprep.subr.mxu0 0.0
    %1160 = vmatpush1.msra.mxu0 %v1062
    %1161 = vmatprep.subr.mxu0 0.0
    %1162 = vmatpush1.msra.mxu0 %v1063
    %1163 = vmatprep.subr.mxu0 0.0
    %1164 = vmatpush1.msra.mxu0 %v1064
    %1165 = vmatprep.subr.mxu0 0.0
    %1166 = vmatpush1.msra.mxu0 %v1065
    %1167 = vmatprep.subr.mxu0 0.0
    %1168 = vmatpush1.msra.mxu0 %v1066
    %1169 = vmatprep.subr.mxu0 0.0
    %1170 = vmatpush1.msra.mxu0 %v1067
    %1171 = vmatprep.subr.mxu0 0.0
    %1172 = vmatpush1.msra.mxu0 %v1068
    %1173 = vmatprep.subr.mxu0 0.0
    %1174 = vmatpush1.msra.mxu0 %v1069
    %1175 = vmatprep.subr.mxu0 0.0
    %1176 = vmatpush1.msra.mxu0 %v1070
    %1177 = vmatprep.subr.mxu0 0.0
    %1178 = vmatpush1.msra.mxu0 %v1071
    %1179 = vmatprep.subr.mxu0 0.0
    %1180 = vmatpush1.msra.mxu0 %v1072
    %1181 = vmatprep.subr.mxu0 0.0
    %1182 = vmatpush1.msra.mxu0 %v1073
    %1183 = vmatprep.subr.mxu0 0.0
    %1184 = vmatpush1.msra.mxu0 %v1074
    %1185 = vmatprep.subr.mxu0 0.0
    %1186 = vmatpush1.msra.mxu0 %v1075
    %1187 = vmatprep.subr.mxu0 0.0
    %1188 = vmatpush1.msra.mxu0 %v1076
    %1189 = vmatprep.subr.mxu0 0.0
    %1190 = vmatpush1.msra.mxu0 %v1077
    %1191 = vmatprep.subr.mxu0 0.0
    %1192 = vmatpush1.msra.mxu0 %v1078
    %1193 = vmatprep.subr.mxu0 0.0
    %1194 = vmatpush1.msra.mxu0 %v1079
    %1195 = vmatprep.subr.mxu0 0.0
    %1196 = vmatpush1.msra.mxu0 %v1080
    %1197 = vmatprep.subr.mxu0 0.0
    %1198 = vmatpush1.msra.mxu0 %v1081
    %1199 = vmatprep.subr.mxu0 0.0
    %1200 = vmatpush1.msra.mxu0 %v1082
    %1201 = vmatprep.subr.mxu0 0.0
    %1202 = vmatpush1.msra.mxu0 %v1083
    %1203 = vmatprep.subr.mxu0 0.0
    %1204 = vmatpush1.msra.mxu0 %v1084
    %1205 = vmatprep.mubr.f32.mxu0 %v1128
    %1206 = vmatmul.mubr.f32.gmra.mrb[0].mxu0 %v1124
    %v1207 = vpop.f32.mrb[0].mxu0
    %v1208 = vadd.f32 %v1119, %v1207
    %v1209 = vpop.f32.mrb[0].mxu0
    %1210 = vdwg.mxu0
    %1211 = vmatprep.subr.mxu0 0.0
    %1212 = vmatpush1.msra.mxu0 %v1085
    %1213 = vmatprep.subr.mxu0 0.0
    %1214 = vmatpush1.msra.mxu0 %v1086
    %1215 = vmatprep.subr.mxu0 0.0
    %1216 = vmatpush1.msra.mxu0 %v1087
    %1217 = vmatprep.subr.mxu0 0.0
    %1218 = vmatpush1.msra.mxu0 %v1088
    %1219 = vmatprep.subr.mxu0 0.0
    %1220 = vmatpush1.msra.mxu0 %v1089
    %1221 = vmatprep.subr.mxu0 0.0
    %1222 = vmatpush1.msra.mxu0 %v1090
    %1223 = vmatprep.subr.mxu0 0.0
    %1224 = vmatpush1.msra.mxu0 %v1091
    %1225 = vmatprep.subr.mxu0 0.0
    %1226 = vmatpush1.msra.mxu0 %v1092
    %1227 = vmatprep.subr.mxu0 0.0
    %1228 = vmatpush1.msra.mxu0 %v1093
    %1229 = vmatprep.subr.mxu0 0.0
    %1230 = vmatpush1.msra.mxu0 %v1094
    %1231 = vmatprep.subr.mxu0 0.0
    %1232 = vmatpush1.msra.mxu0 %v1095
    %1233 = vmatprep.subr.mxu0 0.0
    %1234 = vmatpush1.msra.mxu0 %v1096
    %1235 = vmatprep.subr.mxu0 0.0
    %1236 = vmatpush1.msra.mxu0 %v1097
    %1237 = vmatprep.subr.mxu0 0.0
    %1238 = vmatpush1.msra.mxu0 %v1098
    %1239 = vmatprep.subr.mxu0 0.0
    %1240 = vmatpush1.msra.mxu0 %v1099
    %1241 = vmatprep.subr.mxu0 0.0
    %1242 = vmatpush1.msra.mxu0 %v1100
    %1243 = vmatprep.subr.mxu0 0.0
    %1244 = vmatpush1.msra.mxu0 %v1101
    %1245 = vmatprep.subr.mxu0 0.0
    %1246 = vmatpush1.msra.mxu0 %v1102
    %1247 = vmatprep.subr.mxu0 0.0
    %1248 = vmatpush1.msra.mxu0 %v1103
    %1249 = vmatprep.subr.mxu0 0.0
    %1250 = vmatpush1.msra.mxu0 %v1104
    %1251 = vmatprep.subr.mxu0 0.0
    %1252 = vmatpush1.msra.mxu0 %v1105
    %1253 = vmatprep.subr.mxu0 0.0
    %1254 = vmatpush1.msra.mxu0 %v1106
    %1255 = vmatprep.subr.mxu0 0.0
    %1256 = vmatpush1.msra.mxu0 %v1107
    %1257 = vmatprep.subr.mxu0 0.0
    %1258 = vmatpush1.msra.mxu0 %v1108
    %1259 = vmatprep.subr.mxu0 0.0
    %1260 = vmatpush1.msra.mxu0 %v1109
    %1261 = vmatprep.subr.mxu0 0.0
    %1262 = vmatpush1.msra.mxu0 %v1110
    %1263 = vmatprep.subr.mxu0 0.0
    %1264 = vmatpush1.msra.mxu0 %v1111
    %1265 = vmatprep.subr.mxu0 0.0
    %1266 = vmatpush1.msra.mxu0 %v1112
    %1267 = vmatprep.subr.mxu0 0.0
    %1268 = vmatpush1.msra.mxu0 %v1113
    %1269 = vmatprep.subr.mxu0 0.0
    %1270 = vmatpush1.msra.mxu0 %v1114
    %1271 = vmatprep.subr.mxu0 0.0
    %1272 = vmatpush1.msra.mxu0 %v1115
    %1273 = vmatprep.subr.mxu0 0.0
    %1274 = vmatpush1.msra.mxu0 %v1116
    %1275 = vmatprep.mubr.f32.mxu0 %v1136
    %1276 = vmatmul.mubr.f32.gmra.mrb[0].mxu0 %v1132
    %v1277 = vpop.f32.mrb[0].mxu0
    %v1278 = vadd.f32 %v1208, %v1277
    %v1279 = vpop.f32.mrb[0].mxu0
    %1280 = vdwg.mxu0
    %1281 = vst [vmem:[#allocation3] sm:$0x1] %v1278
    // Predicated region
    $region22: #{tpu_custom_call.1} parent=1 // pred_check
      _
    $region23: #{tpu_custom_call.1} parent=1 // pred_check_branch
      %1283 = sbr.rel (0) target = $region25
    $region24: #{tpu_custom_call.1} parent=1 // pred_region
      %s1285 = ssub.s32 16, 16
      %1286 = vsyncadd [#allocation4], %s1285
      %s1288 = sshll.u32 [#allocation3], 4
      %s1289 = int_to_ptr.vmem [resolvable:$true] %s1288
      %1291 = dma.vmem_to_hbm [thread:$0]  %s1289, 16, %s5, [#allocation4]
    $region25: #{tpu_custom_call.1} parent=1 // pred_fallthru
      _
    // Predicated region
    $region26: #{tpu_custom_call.1} parent=1 // pred_check
      _
    $region27: #{tpu_custom_call.1} parent=1 // pred_check_branch
      %1293 = sbr.rel (0) target = $region29
    $region28: #{tpu_custom_call.1} parent=1 // pred_region
      %1294 = dma.done [#allocation4], 16
    $region29: #{tpu_custom_call.1} parent=1 // pred_fallthru
      _
    %1295 = vsyncpa [#allocation4], 1

</llo_original>
